<compile_context>
chip_gen: v7x
topology: tpu7x:2x2x1
jax: 0.10.0
libtpu: 0.0.40
codegen_flags: <defaults>
</compile_context>

<pallas_src>
import functools

import jax
import jax.numpy as jnp
from jax.experimental import pallas as pl
from jax.experimental.pallas import tpu as pltpu

EPS = 1e-5


def byol_head_kernel(x_ref, w1_ref, g_ref, b_ref, w2_ref, b2_ref, o_ref):
    h_idx = pl.program_id(0)

    @pl.when(h_idx == 0)
    def _init():
        o_ref[...] = jnp.zeros_like(o_ref)

    # ---- Linear 1 (bias=False): bf16 @ bf16 -> f32 on the MXU -----------------
    h = jnp.dot(x_ref[...], w1_ref[...], preferred_element_type=jnp.float32)  # [B, Ht]

    # ---- BatchNorm1d (training-mode stats over the whole, untiled batch) ------
    # Folded into one per-column scale/shift so the [B, Ht] epilogue is
    # a single mul + add + max.  rsqrt goes to the EUP slot.
    inv_b = 1.0 / h.shape[0]
    mean = jnp.sum(h, axis=0, keepdims=True) * inv_b                # [1, Ht]
    var = jnp.sum(h * h, axis=0, keepdims=True) * inv_b - mean * mean
    var = jnp.maximum(var, 0.0)          # guard E[h^2] - mean^2 cancellation
    g = g_ref[pl.ds(h_idx, 1), :]        # [1, Ht] gamma slice (resident param)
    b = b_ref[pl.ds(h_idx, 1), :]        # [1, Ht] beta slice (resident param)
    scale = g * jax.lax.rsqrt(var + EPS)
    shift = b - mean * scale
    h_act = jnp.maximum(h * scale + shift, 0.0)                      # BN + ReLU

    # ---- Linear 2: accumulate this H-tile directly into the resident output --
    o_ref[...] += jnp.dot(h_act.astype(jnp.bfloat16), w2_ref[...],
                          preferred_element_type=jnp.float32)

    @pl.when(h_idx == pl.num_programs(0) - 1)
    def _finalize():
        o_ref[...] = o_ref[...] + b2_ref[...]


def _round_up(n, m):
    return ((n + m - 1) // m) * m


def _pad2(a, shape):
    pads = [(0, t - s) for s, t in zip(a.shape, shape)]
    if all(p == (0, 0) for p in pads):
        return a
    return jnp.pad(a, pads)


def _vmem_budget_bytes():
    # ~75% of physical VMEM: leaves headroom for Mosaic internal scratch and the
    # kernel's own elementwise temporaries (matters most on v7x's 64 MiB).
    try:
        cap = pltpu.get_tpu_info().vmem_capacity_bytes
    except Exception:
        cap = 64 << 20  # conservative (v7x-sized) fallback
    return int(0.75 * cap)


def _choose_h_tile(B, d_in_p, d_hid_p, d_out_p, budget):
    """Largest 128-multiple divisor of d_hid_p whose working set fits the budget."""
    fixed = (B * d_in_p * 2        # x (bf16, single-buffered, resident)
             + 2 * d_hid_p * 4     # gamma + beta (f32, resident)
             + d_out_p * 4         # b2 (f32, resident)
             + B * d_out_p * 4)    # f32 output accumulator (resident)
    per_ht = (2 * d_in_p * 2       # w1 H-slice, double-buffered bf16
              + 2 * d_out_p * 2    # w2 H-slice, double-buffered bf16
              + 4 * B * 4)         # ~4 materialized [B, Ht] f32 temporaries
    ht = d_hid_p
    while ht > 128 and (fixed + per_ht * ht > 0.8 * budget or d_hid_p % ht != 0):
        ht -= 128
    return max(ht, 128)


@functools.partial(jax.jit, static_argnames=("h_tile",))
def byol_projection_head(x, w1, gamma, beta, w2, b2, *, h_tile=None):
    """x: [B, D_in]; w1: [D_hid, D_in]; w2: [D_out, D_hid] (PyTorch layouts)."""
    B, d_in = x.shape
    d_hid = w1.shape[0]
    d_out = w2.shape[0]

    d_in_p = _round_up(d_in, 128)
    d_hid_p = _round_up(d_hid, 128)
    d_out_p = _round_up(d_out, 128)

    budget = _vmem_budget_bytes()
    if h_tile is None:
        ht = _choose_h_tile(B, d_in_p, d_hid_p, d_out_p, budget)
    else:
        ht = max(128, min((int(h_tile) // 128) * 128, d_hid_p))
        while d_hid_p % ht != 0:
            ht -= 128
    n_h = d_hid_p // ht

    # Lane-dense padded operands.  x and weights ship as bf16 (half the DMA
    # bytes, no per-step in-kernel cast); BN params / bias stay f32.
    x_p = _pad2(x.astype(jnp.bfloat16), (B, d_in_p))
    w1_t = _pad2(w1.T.astype(jnp.bfloat16), (d_in_p, d_hid_p))
    w2_t = _pad2(w2.T.astype(jnp.bfloat16), (d_hid_p, d_out_p))
    g_p = _pad2(gamma.astype(jnp.float32).reshape(1, -1), (1, d_hid_p)).reshape(n_h, ht)
    bta_p = _pad2(beta.astype(jnp.float32).reshape(1, -1), (1, d_hid_p)).reshape(n_h, ht)
    b2_p = _pad2(b2.astype(jnp.float32).reshape(1, -1), (1, d_out_p))

    out_p = pl.pallas_call(
        byol_head_kernel,
        out_shape=jax.ShapeDtypeStruct((B, d_out_p), jnp.float32),
        grid_spec=pltpu.PrefetchScalarGridSpec(
            num_scalar_prefetch=0,
            grid=(n_h,),
            in_specs=[
                pl.BlockSpec((B, d_in_p), lambda h: (0, 0),
                             pipeline_mode=pl.Buffered(1)),      # x (bf16, resident)
                pl.BlockSpec((d_in_p, ht), lambda h: (0, h)),    # w1 H-slice (streamed)
                pl.BlockSpec((n_h, ht), lambda h: (0, 0),
                             pipeline_mode=pl.Buffered(1)),      # gamma (resident)
                pl.BlockSpec((n_h, ht), lambda h: (0, 0),
                             pipeline_mode=pl.Buffered(1)),      # beta (resident)
                pl.BlockSpec((ht, d_out_p), lambda h: (h, 0)),   # w2 H-slice (streamed)
                pl.BlockSpec((1, d_out_p), lambda h: (0, 0),
                             pipeline_mode=pl.Buffered(1)),      # b2 (resident)
            ],
            out_specs=pl.BlockSpec((B, d_out_p), lambda h: (0, 0),
                                   pipeline_mode=pl.Buffered(1)),  # resident f32 acc
        ),
        compiler_params=pltpu.CompilerParams(
            # Single grid axis is the H reduction -> arbitrary.  Batch cannot be
            # tiled/parallelized without changing BatchNorm semantics.
            dimension_semantics=("arbitrary",),
            vmem_limit_bytes=budget,
        ),
    )(x_p, w1_t, g_p, bta_p, w2_t, b2_p)

    return out_p[:, :d_out]


def reference(x, w1, gamma, beta, w2, b2):
    h = x @ w1.T
    mean = h.mean(axis=0, keepdims=True)
    var = ((h - mean) ** 2).mean(axis=0, keepdims=True)
    h = (h - mean) / jnp.sqrt(var + EPS) * gamma + beta
    h = jnp.maximum(h, 0.0)
    return h @ w2.T + b2


if __name__ == "__main__":
    # Small shapes consistent with the module (input_dim -> hidden_dim -> output_dim).
    # D_HID=320 pads to 384 so the explicit h_tile=128 run exercises 3 grid steps.
    B, D_IN, D_HID, D_OUT = 8, 32, 320, 16

    key = jax.random.PRNGKey(0)
    kx, kw1, kw2, kb2 = jax.random.split(key, 4)

    x = jax.random.normal(kx, (B, D_IN), dtype=jnp.float32)

    # Parameter shapes follow nn.Linear / nn.BatchNorm1d.
    w1 = jax.random.normal(kw1, (D_HID, D_IN), dtype=jnp.float32) * 0.05   # Linear1, bias=False
    gamma = jnp.ones((D_HID,), dtype=jnp.float32)                          # BN weight
    beta = jnp.zeros((D_HID,), dtype=jnp.float32)                          # BN bias
    w2 = jax.random.normal(kw2, (D_OUT, D_HID), dtype=jnp.float32) * 0.05  # Linear2 weight
    b2 = jax.random.normal(kb2, (D_OUT,), dtype=jnp.float32) * 0.01        # Linear2 bias

    ref = reference(x, w1, gamma, beta, w2, b2)

    # Auto-tiled (fits VMEM -> single grid step, the fast path).
    out_auto = jax.block_until_ready(byol_projection_head(x, w1, gamma, beta, w2, b2))
    # Forced 3-step H-tiled path (exercises the resident-accumulator loop).
    out_tiled = jax.block_until_ready(
        byol_projection_head(x, w1, gamma, beta, w2, b2, h_tile=128))

    assert out_auto.shape == (B, D_OUT)
    assert out_tiled.shape == (B, D_OUT)
    # Looser tolerance: MXU operands are bf16 (f32 accumulation); reference is pure f32.
    assert jnp.allclose(out_auto, ref, atol=5e-2, rtol=5e-2), "auto-tile mismatch vs reference"
    assert jnp.allclose(out_tiled, ref, atol=5e-2, rtol=5e-2), "H-tiled mismatch vs reference"

    print("KERNEL_OK")
</pallas_src>

<mosaic_0001>
module attributes {stable_mosaic.version = 11 : i64} {
  func.func @byol_head_kernel(%arg0: i32, %arg1: memref<8x128xbf16, #tpu.memory_space<vmem>>, %arg2: memref<128x384xbf16, #tpu.memory_space<vmem>>, %arg3: memref<1x384xf32, #tpu.memory_space<vmem>>, %arg4: memref<1x384xf32, #tpu.memory_space<vmem>>, %arg5: memref<384x128xbf16, #tpu.memory_space<vmem>>, %arg6: memref<1x128xf32, #tpu.memory_space<vmem>>, %arg7: memref<8x128xf32, #tpu.memory_space<vmem>>) attributes {dimension_semantics = [#tpu.dimension_semantics<arbitrary>], iteration_bounds = array<i64: 1>, scalar_prefetch = 0 : i64, scratch_operands = 0 : i64, tpu.core_type = #tpu.core_type<tc>, window_params = [{pipeline_mode = #tpu.pipeline_mode<synchronous>, transform_indices = @transform_0, window_bounds = array<i64: 8, 128>}, {transform_indices = @transform_1, window_bounds = array<i64: 128, 384>}, {pipeline_mode = #tpu.pipeline_mode<synchronous>, transform_indices = @transform_2, window_bounds = array<i64: 1, 384>}, {pipeline_mode = #tpu.pipeline_mode<synchronous>, transform_indices = @transform_3, window_bounds = array<i64: 1, 384>}, {transform_indices = @transform_4, window_bounds = array<i64: 384, 128>}, {pipeline_mode = #tpu.pipeline_mode<synchronous>, transform_indices = @transform_5, window_bounds = array<i64: 1, 128>}, {pipeline_mode = #tpu.pipeline_mode<synchronous>, transform_indices = @transform_6, window_bounds = array<i64: 8, 128>}]} {
    %c0_i32 = arith.constant 0 : i32
    %0 = arith.cmpi eq, %arg0, %c0_i32 : i32
    %1 = arith.extui %0 : i1 to i32
    %c0_i32_0 = arith.constant 0 : i32
    %2 = arith.cmpi ne, %1, %c0_i32_0 : i32
    scf.if %2 {
      %cst_22 = arith.constant 0.000000e+00 : f32
      %44 = vector.broadcast %cst_22 : f32 to vector<8x128xf32>
      %c0_23 = arith.constant 0 : index
      %c0_24 = arith.constant 0 : index
      %45 = vector.load %arg7[%c0_23, %c0_24] : memref<8x128xf32, #tpu.memory_space<vmem>>, vector<8x128xf32>
      tpu.vector_store %arg7[%c0_23, %c0_24], %44 {strides = array<i32>} : memref<8x128xf32, #tpu.memory_space<vmem>>, vector<8x128xf32>,
    } else {
    }
    %c0 = arith.constant 0 : index
    %c0_1 = arith.constant 0 : index
    %3 = vector.load %arg1[%c0, %c0_1] : memref<8x128xbf16, #tpu.memory_space<vmem>>, vector<8x128xbf16>
    %c0_2 = arith.constant 0 : index
    %c0_3 = arith.constant 0 : index
    %4 = vector.load %arg2[%c0_2, %c0_3] : memref<128x384xbf16, #tpu.memory_space<vmem>>, vector<128x384xbf16>
    %cst = arith.constant dense<0.000000e+00> : vector<8x384xf32>
    %5 = tpu.matmul %3, %4, %cst {dimension_numbers = #tpu.dot_dimension_numbers<[1], [0], [0], [1], [0, 0, 1, 1], [], []>} : vector<8x128xbf16>, vector<128x384xbf16>, vector<8x384xf32> -> vector<8x384xf32>
    %cst_4 = arith.constant dense<0.000000e+00> : vector<384xf32>
    %6 = vector.multi_reduction <add>, %5, %cst_4 [0] : vector<8x384xf32> to vector<384xf32>
    %7 = vector.shape_cast %6 : vector<384xf32> to vector<1x384xf32>
    %cst_5 = arith.constant 1.250000e-01 : f32
    %8 = vector.broadcast %cst_5 : f32 to vector<1x384xf32>
    %9 = arith.mulf %7, %8 : vector<1x384xf32>
    %10 = arith.mulf %5, %5 : vector<8x384xf32>
    %cst_6 = arith.constant dense<0.000000e+00> : vector<384xf32>
    %11 = vector.multi_reduction <add>, %10, %cst_6 [0] : vector<8x384xf32> to vector<384xf32>
    %12 = vector.shape_cast %11 : vector<384xf32> to vector<1x384xf32>
    %cst_7 = arith.constant 1.250000e-01 : f32
    %13 = vector.broadcast %cst_7 : f32 to vector<1x384xf32>
    %14 = arith.mulf %12, %13 : vector<1x384xf32>
    %15 = arith.mulf %9, %9 : vector<1x384xf32>
    %16 = arith.subf %14, %15 : vector<1x384xf32>
    %cst_8 = arith.constant 0.000000e+00 : f32
    %17 = vector.broadcast %cst_8 : f32 to vector<1x384xf32>
    %18 = arith.maximumf %16, %17 : vector<1x384xf32>
    %19 = arith.index_cast %arg0 : i32 to index
    %c0_9 = arith.constant 0 : index
    %20 = vector.load %arg3[%19, %c0_9] : memref<1x384xf32, #tpu.memory_space<vmem>>, vector<1x384xf32>
    %21 = arith.index_cast %arg0 : i32 to index
    %c0_10 = arith.constant 0 : index
    %22 = vector.load %arg4[%21, %c0_10] : memref<1x384xf32, #tpu.memory_space<vmem>>, vector<1x384xf32>
    %cst_11 = arith.constant 9.99999974E-6 : f32
    %23 = vector.broadcast %cst_11 : f32 to vector<1x384xf32>
    %24 = arith.addf %18, %23 : vector<1x384xf32>
    %25 = math.rsqrt %24 : vector<1x384xf32>
    %26 = arith.mulf %20, %25 : vector<1x384xf32>
    %27 = arith.mulf %9, %26 : vector<1x384xf32>
    %28 = arith.subf %22, %27 : vector<1x384xf32>
    %29 = vector.broadcast %26 : vector<1x384xf32> to vector<8x384xf32>
    %30 = arith.mulf %5, %29 : vector<8x384xf32>
    %31 = vector.broadcast %28 : vector<1x384xf32> to vector<8x384xf32>
    %32 = arith.addf %30, %31 : vector<8x384xf32>
    %cst_12 = arith.constant 0.000000e+00 : f32
    %33 = vector.broadcast %cst_12 : f32 to vector<8x384xf32>
    %34 = arith.maximumf %32, %33 : vector<8x384xf32>
    %c0_13 = arith.constant 0 : index
    %c0_14 = arith.constant 0 : index
    %35 = vector.load %arg7[%c0_13, %c0_14] : memref<8x128xf32, #tpu.memory_space<vmem>>, vector<8x128xf32>
    %36 = arith.truncf %34 : vector<8x384xf32> to vector<8x384xbf16>
    %c0_15 = arith.constant 0 : index
    %c0_16 = arith.constant 0 : index
    %37 = vector.load %arg5[%c0_15, %c0_16] : memref<384x128xbf16, #tpu.memory_space<vmem>>, vector<384x128xbf16>
    %cst_17 = arith.constant dense<0.000000e+00> : vector<8x128xf32>
    %38 = tpu.matmul %36, %37, %cst_17 {dimension_numbers = #tpu.dot_dimension_numbers<[1], [0], [0], [1], [0, 0, 1, 1], [], []>} : vector<8x384xbf16>, vector<384x128xbf16>, vector<8x128xf32> -> vector<8x128xf32>
    %39 = arith.addf %35, %38 : vector<8x128xf32>
    %c0_18 = arith.constant 0 : index
    %c0_19 = arith.constant 0 : index
    %40 = vector.load %arg7[%c0_18, %c0_19] : memref<8x128xf32, #tpu.memory_space<vmem>>, vector<8x128xf32>
    tpu.vector_store %arg7[%c0_18, %c0_19], %39 {strides = array<i32>} : memref<8x128xf32, #tpu.memory_space<vmem>>, vector<8x128xf32>,
    %c0_i32_20 = arith.constant 0 : i32
    %41 = arith.cmpi eq, %arg0, %c0_i32_20 : i32
    %42 = arith.extui %41 : i1 to i32
    %c0_i32_21 = arith.constant 0 : i32
    %43 = arith.cmpi ne, %42, %c0_i32_21 : i32
    scf.if %43 {
      %c0_22 = arith.constant 0 : index
      %c0_23 = arith.constant 0 : index
      %44 = vector.load %arg7[%c0_22, %c0_23] : memref<8x128xf32, #tpu.memory_space<vmem>>, vector<8x128xf32>
      %c0_24 = arith.constant 0 : index
      %c0_25 = arith.constant 0 : index
      %45 = vector.load %arg6[%c0_24, %c0_25] : memref<1x128xf32, #tpu.memory_space<vmem>>, vector<1x128xf32>
      %46 = vector.broadcast %45 : vector<1x128xf32> to vector<8x128xf32>
      %47 = arith.addf %44, %46 : vector<8x128xf32>
      %c0_26 = arith.constant 0 : index
      %c0_27 = arith.constant 0 : index
      %48 = vector.load %arg7[%c0_26, %c0_27] : memref<8x128xf32, #tpu.memory_space<vmem>>, vector<8x128xf32>
      tpu.vector_store %arg7[%c0_26, %c0_27], %47 {strides = array<i32>} : memref<8x128xf32, #tpu.memory_space<vmem>>, vector<8x128xf32>,
    } else {
    }
    return
  }
  func.func @transform_0(%arg0: i32) -> (i32, i32) {
    %c0_i32 = arith.constant 0 : i32
    %c0_i32_0 = arith.constant 0 : i32
    %c0_i32_1 = arith.constant 0 : i32
    return %c0_i32, %c0_i32_0 : i32, i32
  }
  func.func @transform_1(%arg0: i32) -> (i32, i32) {
    %c0_i32 = arith.constant 0 : i32
    %c0_i32_0 = arith.constant 0 : i32
    return %c0_i32, %arg0 : i32, i32
  }
  func.func @transform_2(%arg0: i32) -> (i32, i32) {
    %c0_i32 = arith.constant 0 : i32
    %c0_i32_0 = arith.constant 0 : i32
    %c0_i32_1 = arith.constant 0 : i32
    return %c0_i32, %c0_i32_0 : i32, i32
  }
  func.func @transform_3(%arg0: i32) -> (i32, i32) {
    %c0_i32 = arith.constant 0 : i32
    %c0_i32_0 = arith.constant 0 : i32
    %c0_i32_1 = arith.constant 0 : i32
    return %c0_i32, %c0_i32_0 : i32, i32
  }
  func.func @transform_4(%arg0: i32) -> (i32, i32) {
    %c0_i32 = arith.constant 0 : i32
    %c0_i32_0 = arith.constant 0 : i32
    return %arg0, %c0_i32 : i32, i32
  }
  func.func @transform_5(%arg0: i32) -> (i32, i32) {
    %c0_i32 = arith.constant 0 : i32
    %c0_i32_0 = arith.constant 0 : i32
    %c0_i32_1 = arith.constant 0 : i32
    return %c0_i32, %c0_i32_0 : i32, i32
  }
  func.func @transform_6(%arg0: i32) -> (i32, i32) {
    %c0_i32 = arith.constant 0 : i32
    %c0_i32_0 = arith.constant 0 : i32
    %c0_i32_1 = arith.constant 0 : i32
    return %c0_i32, %c0_i32_0 : i32, i32
  }
}

</mosaic_0001>

<llo_original>
// kernel: byol_projection_head.1
$region0: #{byol_projection_head.1}
  #allocation0 [shape = 'u32[]', space=smem, size = 0x4, offset = 0x4, fixed_abs, tag = 'smem constant byte address 0x4 - core index']
  #allocation1 [shape = 'u32[144,128]{1,0:T(1,128)}', space=vmem, size = 0x12000, scoped, tag = 'internal scratch']
  %s0 = inlined_call_operand.vmem [shape: bf16[8,128], index: 0, kind: input, shape index: {}]
  %s1 = inlined_call_operand.vmem [shape: bf16[128,384], index: 1, kind: input, shape index: {}]
  %s2 = inlined_call_operand.vmem [shape: f32[1,384], index: 2, kind: input, shape index: {}]
  %s3 = inlined_call_operand.vmem [shape: f32[1,384], index: 3, kind: input, shape index: {}]
  %s4 = inlined_call_operand.vmem [shape: bf16[384,128], index: 4, kind: input, shape index: {}]
  %s5 = inlined_call_operand.vmem [shape: f32[1,128], index: 5, kind: input, shape index: {}]
  %s6 = inlined_call_operand.hbm [shape: f32[8,128], index: 6, kind: output, shape index: {}]
  %s7 = sld [smem:[#allocation0]]
  $region42: #{byol_projection_head.1} parent=0
    _
  %s9 = ssub.s32 1, %s7
  %s10 = scalar_select 0, %s9, %s7
  $region1: #{byol_projection_head.1} parent=0
    #allocation2 [shape = 'u8[4096]{0}', space=vmem, size = 0x1000, scoped, tag = 'output window, operand 0, single buffered']
    #allocation3 [shape = 's32[1]{0}', space=sflag, size = 0x4, scoped, tag = 'scoped memory for byol_projection_head.1']
    %11 = vsyncpa [#allocation3], 0
    // Predicated region
    $region2: #{byol_projection_head.1} parent=1 // pred_check
      _
    $region3: #{byol_projection_head.1} parent=1 // pred_check_branch
      %13 = sbr.rel (0) target = $region5
    $region4: #{byol_projection_head.1} parent=1 // pred_region
      _
    $region5: #{byol_projection_head.1} parent=1 // pred_fallthru
      _
    // Predicated region
    $region6: #{byol_projection_head.1} parent=1 // pred_check
      _
    $region7: #{byol_projection_head.1} parent=1 // pred_check_branch
      %15 = sbr.rel (0) target = $region9
    $region8: #{byol_projection_head.1} parent=1 // pred_region
      _
    $region9: #{byol_projection_head.1} parent=1 // pred_fallthru
      _
    // Predicated region
    $region10: #{byol_projection_head.1} parent=1 // pred_check
      _
    $region11: #{byol_projection_head.1} parent=1 // pred_check_branch
      %17 = sbr.rel (0) target = $region13
    $region12: #{byol_projection_head.1} parent=1 // pred_region
      _
    $region13: #{byol_projection_head.1} parent=1 // pred_fallthru
      _
    // Predicated region
    $region14: #{byol_projection_head.1} parent=1 // pred_check
      _
    $region15: #{byol_projection_head.1} parent=1 // pred_check_branch
      %19 = sbr.rel (0) target = $region17
    $region16: #{byol_projection_head.1} parent=1 // pred_region
      _
    $region17: #{byol_projection_head.1} parent=1 // pred_fallthru
      _
    // Predicated region
    $region18: #{byol_projection_head.1} parent=1 // pred_check
      _
    $region19: #{byol_projection_head.1} parent=1 // pred_check_branch
      %21 = sbr.rel (0) target = $region21
    $region20: #{byol_projection_head.1} parent=1 // pred_region
      _
    $region21: #{byol_projection_head.1} parent=1 // pred_fallthru
      _
    // Predicated region
    $region22: #{byol_projection_head.1} parent=1 // pred_check
      _
    $region23: #{byol_projection_head.1} parent=1 // pred_check_branch
      %23 = sbr.rel (0) target = $region25
    $region24: #{byol_projection_head.1} parent=1 // pred_region
      _
    $region25: #{byol_projection_head.1} parent=1 // pred_fallthru
      _
    %p25 = scmp.eq.s32.totalorder 0, 0
    // Predicated region
    $region26: #{byol_projection_head.1} parent=1 // pred_check
      %p26 = pneg %p25
    $region27: #{byol_projection_head.1} parent=1 // pred_check_branch
      %28 = sbr.rel (%p26) target = $region29
    $region28: #{byol_projection_head.1} parent=1 // pred_region
      %29 = vst [vmem:[#allocation2] sm:$0xff] 0.0
    $region29: #{byol_projection_head.1} parent=1 // pred_fallthru
      _
    %v30 = vld [vmem:[%s0] sm:$0xf]
    %v31 = vld [vmem:[%s1] sm:$0xff]
    %v32 = vld [vmem:[%s1 + $0x8] sm:$0xf]
    %v33 = vld [vmem:[%s1 + $0xc] sm:$0xff]
    %v34 = vld [vmem:[%s1 + $0x14] sm:$0xf]
    %v35 = vld [vmem:[%s1 + $0x18] sm:$0xff]
    %v36 = vld [vmem:[%s1 + $0x20] sm:$0xf]
    %v37 = vld [vmem:[%s1 + $0x24] sm:$0xff]
    %v38 = vld [vmem:[%s1 + $0x2c] sm:$0xf]
    %v39 = vld [vmem:[%s1 + $0x30] sm:$0xff]
    %v40 = vld [vmem:[%s1 + $0x38] sm:$0xf]
    %v41 = vld [vmem:[%s1 + $0x3c] sm:$0xff]
    %v42 = vld [vmem:[%s1 + $0x44] sm:$0xf]
    %v43 = vld [vmem:[%s1 + $0x48] sm:$0xff]
    %v44 = vld [vmem:[%s1 + $0x50] sm:$0xf]
    %v45 = vld [vmem:[%s1 + $0x54] sm:$0xff]
    %v46 = vld [vmem:[%s1 + $0x5c] sm:$0xf]
    %v47 = vld [vmem:[%s1 + $0x60] sm:$0xff]
    %v48 = vld [vmem:[%s1 + $0x68] sm:$0xf]
    %v49 = vld [vmem:[%s1 + $0x6c] sm:$0xff]
    %v50 = vld [vmem:[%s1 + $0x74] sm:$0xf]
    %v51 = vld [vmem:[%s1 + $0x78] sm:$0xff]
    %v52 = vld [vmem:[%s1 + $0x80] sm:$0xf]
    %v53 = vld [vmem:[%s1 + $0x84] sm:$0xff]
    %v54 = vld [vmem:[%s1 + $0x8c] sm:$0xf]
    %v55 = vld [vmem:[%s1 + $0x90] sm:$0xff]
    %v56 = vld [vmem:[%s1 + $0x98] sm:$0xf]
    %v57 = vld [vmem:[%s1 + $0x9c] sm:$0xff]
    %v58 = vld [vmem:[%s1 + $0xa4] sm:$0xf]
    %v59 = vld [vmem:[%s1 + $0xa8] sm:$0xff]
    %v60 = vld [vmem:[%s1 + $0xb0] sm:$0xf]
    %v61 = vld [vmem:[%s1 + $0xb4] sm:$0xff]
    %v62 = vld [vmem:[%s1 + $0xbc] sm:$0xf]
    %v95 = vunpack.c.l.b16 %v31
    %v96 = vunpack.c.h.b16 %v31
    %v97 = vunpack.c.l.b16 %v32
    %v98 = vunpack.c.l.b16 %v33
    %v99 = vunpack.c.h.b16 %v33
    %v100 = vunpack.c.l.b16 %v34
    %v101 = vunpack.c.l.b16 %v35
    %v102 = vunpack.c.h.b16 %v35
    %v103 = vunpack.c.l.b16 %v36
    %v104 = vunpack.c.l.b16 %v37
    %v105 = vunpack.c.h.b16 %v37
    %v106 = vunpack.c.l.b16 %v38
    %v107 = vunpack.c.l.b16 %v39
    %v108 = vunpack.c.h.b16 %v39
    %v109 = vunpack.c.l.b16 %v40
    %v110 = vunpack.c.l.b16 %v41
    %v111 = vunpack.c.h.b16 %v41
    %v112 = vunpack.c.l.b16 %v42
    %v113 = vunpack.c.l.b16 %v43
    %v114 = vunpack.c.h.b16 %v43
    %v115 = vunpack.c.l.b16 %v44
    %v116 = vunpack.c.l.b16 %v45
    %v117 = vunpack.c.h.b16 %v45
    %v118 = vunpack.c.l.b16 %v46
    %v119 = vunpack.c.l.b16 %v47
    %v120 = vunpack.c.h.b16 %v47
    %v121 = vunpack.c.l.b16 %v48
    %v122 = vunpack.c.l.b16 %v49
    %v123 = vunpack.c.h.b16 %v49
    %v124 = vunpack.c.l.b16 %v50
    %v125 = vunpack.c.l.b16 %v51
    %v126 = vunpack.c.h.b16 %v51
    %v127 = vunpack.c.l.b16 %v52
    %v128 = vunpack.c.l.b16 %v53
    %v129 = vunpack.c.h.b16 %v53
    %v130 = vunpack.c.l.b16 %v54
    %v131 = vunpack.c.l.b16 %v55
    %v132 = vunpack.c.h.b16 %v55
    %v133 = vunpack.c.l.b16 %v56
    %v134 = vunpack.c.l.b16 %v57
    %v135 = vunpack.c.h.b16 %v57
    %v136 = vunpack.c.l.b16 %v58
    %v137 = vunpack.c.l.b16 %v59
    %v138 = vunpack.c.h.b16 %v59
    %v139 = vunpack.c.l.b16 %v60
    %v140 = vunpack.c.l.b16 %v61
    %v141 = vunpack.c.h.b16 %v61
    %v142 = vunpack.c.l.b16 %v62
    %v143 = vpack.c.b16 %v98, %v95
    %v144 = vpack.c.b16 %v99, %v96
    %v145 = vpack.c.b16 %v100, %v97
    %v146 = vpack.c.b16 %v104, %v101
    %v147 = vpack.c.b16 %v105, %v102
    %v148 = vpack.c.b16 %v106, %v103
    %v149 = vpack.c.b16 %v110, %v107
    %v150 = vpack.c.b16 %v111, %v108
    %v151 = vpack.c.b16 %v112, %v109
    %v152 = vpack.c.b16 %v116, %v113
    %v153 = vpack.c.b16 %v117, %v114
    %v154 = vpack.c.b16 %v118, %v115
    %v155 = vpack.c.b16 %v122, %v119
    %v156 = vpack.c.b16 %v123, %v120
    %v157 = vpack.c.b16 %v124, %v121
    %v158 = vpack.c.b16 %v128, %v125
    %v159 = vpack.c.b16 %v129, %v126
    %v160 = vpack.c.b16 %v130, %v127
    %v161 = vpack.c.b16 %v134, %v131
    %v162 = vpack.c.b16 %v135, %v132
    %v163 = vpack.c.b16 %v136, %v133
    %v164 = vpack.c.b16 %v140, %v137
    %v165 = vpack.c.b16 %v141, %v138
    %v166 = vpack.c.b16 %v142, %v139
    %191 = vmatprep.subr.bf16.mxu0 %v144
    %192 = vmatpush1.bf16.msra.mxu0 %v143
    %193 = vmatprep.subr.bf16.mxu0 %v147
    %194 = vmatpush1.bf16.msra.mxu0 %v146
    %195 = vmatprep.subr.bf16.mxu0 %v150
    %196 = vmatpush1.bf16.msra.mxu0 %v149
    %197 = vmatprep.subr.bf16.mxu0 %v153
    %198 = vmatpush1.bf16.msra.mxu0 %v152
    %199 = vmatprep.subr.bf16.mxu0 %v156
    %200 = vmatpush1.bf16.msra.mxu0 %v155
    %201 = vmatprep.subr.bf16.mxu0 %v159
    %202 = vmatpush1.bf16.msra.mxu0 %v158
    %203 = vmatprep.subr.bf16.mxu0 %v162
    %204 = vmatpush1.bf16.msra.mxu0 %v161
    %205 = vmatprep.subr.bf16.mxu0 %v165
    %206 = vmatpush1.bf16.msra.mxu0 %v164
    %207 = vmatprep.subr.bf16.mxu0 0
    %208 = vmatpush1.bf16.msra.mxu0 0
    %209 = vmatprep.subr.bf16.mxu0 0
    %210 = vmatpush1.bf16.msra.mxu0 0
    %211 = vmatprep.subr.bf16.mxu0 0
    %212 = vmatpush1.bf16.msra.mxu0 0
    %213 = vmatprep.subr.bf16.mxu0 0
    %214 = vmatpush1.bf16.msra.mxu0 0
    %215 = vmatprep.subr.bf16.mxu0 0
    %216 = vmatpush1.bf16.msra.mxu0 0
    %217 = vmatprep.subr.bf16.mxu0 0
    %218 = vmatpush1.bf16.msra.mxu0 0
    %219 = vmatprep.subr.bf16.mxu0 0
    %220 = vmatpush1.bf16.msra.mxu0 0
    %221 = vmatprep.subr.bf16.mxu0 0
    %222 = vmatpush1.bf16.msra.mxu0 0
    %223 = vmatprep.mubr.bf16.mxu0 0
    %224 = vmatmul.mubr.bf16.gmra.mrb[0].mxu0 %v30
    %v225 = vpop.f32.mrb[0].mxu0
    %v226 = vadd.f32 0.0, %v225
    %v227 = vpop.f32.mrb[0].mxu0
    %v228 = vadd.f32 0.0, %v227
    %v229 = vpop.f32.mrb[0].mxu0
    %v230 = vpop.f32.mrb[0].mxu0
    %231 = vdwg.mxu0
    %232 = vmatprep.subr.bf16.mxu0 0
    %233 = vmatpush1.bf16.msra.mxu0 %v145
    %234 = vmatprep.subr.bf16.mxu0 0
    %235 = vmatpush1.bf16.msra.mxu0 %v148
    %236 = vmatprep.subr.bf16.mxu0 0
    %237 = vmatpush1.bf16.msra.mxu0 %v151
    %238 = vmatprep.subr.bf16.mxu0 0
    %239 = vmatpush1.bf16.msra.mxu0 %v154
    %240 = vmatprep.subr.bf16.mxu0 0
    %241 = vmatpush1.bf16.msra.mxu0 %v157
    %242 = vmatprep.subr.bf16.mxu0 0
    %243 = vmatpush1.bf16.msra.mxu0 %v160
    %244 = vmatprep.subr.bf16.mxu0 0
    %245 = vmatpush1.bf16.msra.mxu0 %v163
    %246 = vmatprep.subr.bf16.mxu0 0
    %247 = vmatpush1.bf16.msra.mxu0 %v166
    %248 = vmatprep.subr.bf16.mxu0 0
    %249 = vmatpush1.bf16.msra.mxu0 0
    %250 = vmatprep.subr.bf16.mxu0 0
    %251 = vmatpush1.bf16.msra.mxu0 0
    %252 = vmatprep.subr.bf16.mxu0 0
    %253 = vmatpush1.bf16.msra.mxu0 0
    %254 = vmatprep.subr.bf16.mxu0 0
    %255 = vmatpush1.bf16.msra.mxu0 0
    %256 = vmatprep.subr.bf16.mxu0 0
    %257 = vmatpush1.bf16.msra.mxu0 0
    %258 = vmatprep.subr.bf16.mxu0 0
    %259 = vmatpush1.bf16.msra.mxu0 0
    %260 = vmatprep.subr.bf16.mxu0 0
    %261 = vmatpush1.bf16.msra.mxu0 0
    %262 = vmatprep.subr.bf16.mxu0 0
    %263 = vmatpush1.bf16.msra.mxu0 0
    %264 = vmatprep.mubr.bf16.mxu0 0
    %265 = vmatmul.mubr.bf16.gmra.mrb[0].mxu0 %v30
    %v266 = vpop.f32.mrb[0].mxu0
    %v267 = vadd.f32 0.0, %v266
    %v268 = vpop.f32.mrb[0].mxu0
    %v269 = vpop.f32.mrb[0].mxu0
    %v270 = vpop.f32.mrb[0].mxu0
    %271 = vdwg.mxu0
    %v272 = vrot.slane %v226, 4
    %v273 = vadd.f32 %v226, %v272
    %v274 = vrot.slane %v273, 2
    %v275 = vadd.f32 %v273, %v274
    %v276 = vrot.slane %v275, 1
    %v277 = vadd.f32 %v275, %v276
    %v278 = vrot.slane %v228, 4
    %v279 = vadd.f32 %v228, %v278
    %v280 = vrot.slane %v279, 2
    %v281 = vadd.f32 %v279, %v280
    %v282 = vrot.slane %v281, 1
    %v283 = vadd.f32 %v281, %v282
    %v284 = vrot.slane %v267, 4
    %v285 = vadd.f32 %v267, %v284
    %v286 = vrot.slane %v285, 2
    %v287 = vadd.f32 %v285, %v286
    %v288 = vrot.slane %v287, 1
    %v289 = vadd.f32 %v287, %v288
    %v290 = vmul.f32 %v277, 0.125
    %v291 = vmul.f32 %v283, 0.125
    %v292 = vmul.f32 %v289, 0.125
    %v293 = vmul.f32 %v226, %v226
    %v294 = vmul.f32 %v228, %v228
    %v295 = vmul.f32 %v267, %v267
    %v296 = vrot.slane %v293, 4
    %v297 = vadd.f32 %v293, %v296
    %v298 = vrot.slane %v297, 2
    %v299 = vadd.f32 %v297, %v298
    %v300 = vrot.slane %v299, 1
    %v301 = vadd.f32 %v299, %v300
    %v302 = vrot.slane %v294, 4
    %v303 = vadd.f32 %v294, %v302
    %v304 = vrot.slane %v303, 2
    %v305 = vadd.f32 %v303, %v304
    %v306 = vrot.slane %v305, 1
    %v307 = vadd.f32 %v305, %v306
    %v308 = vrot.slane %v295, 4
    %v309 = vadd.f32 %v295, %v308
    %v310 = vrot.slane %v309, 2
    %v311 = vadd.f32 %v309, %v310
    %v312 = vrot.slane %v311, 1
    %v313 = vadd.f32 %v311, %v312
    %v314 = vmul.f32 %v301, 0.125
    %v315 = vmul.f32 %v307, 0.125
    %v316 = vmul.f32 %v313, 0.125
    %v317 = vmul.f32 %v290, %v290
    %v318 = vmul.f32 %v291, %v291
    %v319 = vmul.f32 %v292, %v292
    %v320 = vsub.f32 %v314, %v317
    %v321 = vsub.f32 %v315, %v318
    %v322 = vsub.f32 %v316, %v319
    %v323 = vmax.f32 %v320, 0.0
    %v324 = vmax.f32 %v321, 0.0
    %v325 = vmax.f32 %v322, 0.0
    %s326 = smul.u32 0, 3
    %s327 = scalar_lea.vmem %s2, %s326
    %v328 = vld [vmem:[%s327] sm:$0x7]
    %s329 = scalar_lea.vmem %s3, %s326
    %v330 = vld [vmem:[%s329] sm:$0x7]
    %v331 = vadd.f32 %v323, 1e-05
    %v332 = vadd.f32 %v324, 1e-05
    %v333 = vadd.f32 %v325, 1e-05
    %v334 = vrsqrt.pop %v331
    %v335 = vrsqrt.pop %v332
    %v336 = vrsqrt.pop %v333
    %v340 = vcombine.low %v334, %v335
    %v342 = vunpack.c.l.s4 1966171168
    %v343 = vunpack.c.0.s8 %v342
    %v344 = vlaneseq
    %v345 = vshrl.u32 %v344, 7
    %v346 = vsub.s32 %v343, %v345
    %v347 = vrot.slane %v340, %v346
    %v349 = vunpack.c.l.s4 1966171168
    %v350 = vunpack.c.0.s8 %v349
    %v351 = vlaneseq
    %v352 = vshrl.u32 %v351, 7
    %v353 = vsub.s32 %v350, %v352
    %v354 = vrot.slane %v336, %v353
    %v355 = vcombine.low %v347, %v354
    %v357 = vunpack.c.l.s4 1966171168
    %v358 = vunpack.c.0.s8 %v357
    %v359 = vlaneseq
    %v360 = vshrl.u32 %v359, 7
    %v361 = vsub.s32 %v358, %v360
    %v362 = vrot.slane %v355, %v361
    %v364 = vmul.f32 %v328, %v362
    %v366 = vlaneseq
    %v367 = vshrl.u32 %v366, 7
    %v368 = vsub.s32 0, %v367
    %v369 = vrot.slane %v364, %v368
    %v370 = vlaneseq
    %v371 = vshrl.u32 %v370, 7
    %v372 = vsub.s32 1, %v371
    %v373 = vrot.slane %v364, %v372
    %v374 = vlaneseq
    %v375 = vshrl.u32 %v374, 7
    %v376 = vsub.s32 2, %v375
    %v377 = vrot.slane %v364, %v376
    %v381 = vmul.f32 %v290, %v369
    %v382 = vmul.f32 %v291, %v373
    %v383 = vmul.f32 %v292, %v377
    %v387 = vcombine.low %v381, %v382
    %v389 = vunpack.c.l.s4 1966171168
    %v390 = vunpack.c.0.s8 %v389
    %v391 = vlaneseq
    %v392 = vshrl.u32 %v391, 7
    %v393 = vsub.s32 %v390, %v392
    %v394 = vrot.slane %v387, %v393
    %v396 = vunpack.c.l.s4 1966171168
    %v397 = vunpack.c.0.s8 %v396
    %v398 = vlaneseq
    %v399 = vshrl.u32 %v398, 7
    %v400 = vsub.s32 %v397, %v399
    %v401 = vrot.slane %v383, %v400
    %v402 = vcombine.low %v394, %v401
    %v404 = vunpack.c.l.s4 1966171168
    %v405 = vunpack.c.0.s8 %v404
    %v406 = vlaneseq
    %v407 = vshrl.u32 %v406, 7
    %v408 = vsub.s32 %v405, %v407
    %v409 = vrot.slane %v402, %v408
    %v411 = vsub.f32 %v330, %v409
    %v412 = vmul.f32 %v226, %v369
    %v413 = vmul.f32 %v228, %v373
    %v414 = vmul.f32 %v267, %v377
    %v416 = vlaneseq
    %v417 = vshrl.u32 %v416, 7
    %v418 = vsub.s32 0, %v417
    %v419 = vrot.slane %v411, %v418
    %v420 = vlaneseq
    %v421 = vshrl.u32 %v420, 7
    %v422 = vsub.s32 1, %v421
    %v423 = vrot.slane %v411, %v422
    %v424 = vlaneseq
    %v425 = vshrl.u32 %v424, 7
    %v426 = vsub.s32 2, %v425
    %v427 = vrot.slane %v411, %v426
    %v431 = vadd.f32 %v412, %v419
    %v432 = vadd.f32 %v413, %v423
    %v433 = vadd.f32 %v414, %v427
    %v434 = vmax.f32 %v431, 0.0
    %v435 = vmax.f32 %v432, 0.0
    %v436 = vmax.f32 %v433, 0.0
    %v437 = vld [vmem:[#allocation2] sm:$0xff]
    %v438 = vpack.c.bf16 %v434, %v434
    %v439 = vpack.c.bf16 %v435, %v435
    %v440 = vpack.c.bf16 %v436, %v436
    %v441 = vld [vmem:[%s4] sm:$0xf]
    %v442 = vld [vmem:[%s4 + $0x4] sm:$0xf]
    %v443 = vld [vmem:[%s4 + $0x8] sm:$0xf]
    %v444 = vld [vmem:[%s4 + $0xc] sm:$0xf]
    %v445 = vld [vmem:[%s4 + $0x10] sm:$0xf]
    %v446 = vld [vmem:[%s4 + $0x14] sm:$0xf]
    %v447 = vld [vmem:[%s4 + $0x18] sm:$0xf]
    %v448 = vld [vmem:[%s4 + $0x1c] sm:$0xf]
    %v449 = vld [vmem:[%s4 + $0x20] sm:$0xf]
    %v450 = vld [vmem:[%s4 + $0x24] sm:$0xf]
    %v451 = vld [vmem:[%s4 + $0x28] sm:$0xf]
    %v452 = vld [vmem:[%s4 + $0x2c] sm:$0xf]
    %v453 = vld [vmem:[%s4 + $0x30] sm:$0xf]
    %v454 = vld [vmem:[%s4 + $0x34] sm:$0xf]
    %v455 = vld [vmem:[%s4 + $0x38] sm:$0xf]
    %v456 = vld [vmem:[%s4 + $0x3c] sm:$0xf]
    %v457 = vld [vmem:[%s4 + $0x40] sm:$0xf]
    %v458 = vld [vmem:[%s4 + $0x44] sm:$0xf]
    %v459 = vld [vmem:[%s4 + $0x48] sm:$0xf]
    %v460 = vld [vmem:[%s4 + $0x4c] sm:$0xf]
    %v461 = vld [vmem:[%s4 + $0x50] sm:$0xf]
    %v462 = vld [vmem:[%s4 + $0x54] sm:$0xf]
    %v463 = vld [vmem:[%s4 + $0x58] sm:$0xf]
    %v464 = vld [vmem:[%s4 + $0x5c] sm:$0xf]
    %v465 = vld [vmem:[%s4 + $0x60] sm:$0xf]
    %v466 = vld [vmem:[%s4 + $0x64] sm:$0xf]
    %v467 = vld [vmem:[%s4 + $0x68] sm:$0xf]
    %v468 = vld [vmem:[%s4 + $0x6c] sm:$0xf]
    %v469 = vld [vmem:[%s4 + $0x70] sm:$0xf]
    %v470 = vld [vmem:[%s4 + $0x74] sm:$0xf]
    %v471 = vld [vmem:[%s4 + $0x78] sm:$0xf]
    %v472 = vld [vmem:[%s4 + $0x7c] sm:$0xf]
    %v473 = vld [vmem:[%s4 + $0x80] sm:$0xf]
    %v474 = vld [vmem:[%s4 + $0x84] sm:$0xf]
    %v475 = vld [vmem:[%s4 + $0x88] sm:$0xf]
    %v476 = vld [vmem:[%s4 + $0x8c] sm:$0xf]
    %v477 = vld [vmem:[%s4 + $0x90] sm:$0xf]
    %v478 = vld [vmem:[%s4 + $0x94] sm:$0xf]
    %v479 = vld [vmem:[%s4 + $0x98] sm:$0xf]
    %v480 = vld [vmem:[%s4 + $0x9c] sm:$0xf]
    %v481 = vld [vmem:[%s4 + $0xa0] sm:$0xf]
    %v482 = vld [vmem:[%s4 + $0xa4] sm:$0xf]
    %v483 = vld [vmem:[%s4 + $0xa8] sm:$0xf]
    %v484 = vld [vmem:[%s4 + $0xac] sm:$0xf]
    %v485 = vld [vmem:[%s4 + $0xb0] sm:$0xf]
    %v486 = vld [vmem:[%s4 + $0xb4] sm:$0xf]
    %v487 = vld [vmem:[%s4 + $0xb8] sm:$0xf]
    %v488 = vld [vmem:[%s4 + $0xbc] sm:$0xf]
    %v537 = vunpack.c.l.b16 %v441
    %v538 = vunpack.c.l.b16 %v442
    %v539 = vunpack.c.l.b16 %v443
    %v540 = vunpack.c.l.b16 %v444
    %v541 = vunpack.c.l.b16 %v445
    %v542 = vunpack.c.l.b16 %v446
    %v543 = vunpack.c.l.b16 %v447
    %v544 = vunpack.c.l.b16 %v448
    %v545 = vunpack.c.l.b16 %v449
    %v546 = vunpack.c.l.b16 %v450
    %v547 = vunpack.c.l.b16 %v451
    %v548 = vunpack.c.l.b16 %v452
    %v549 = vunpack.c.l.b16 %v453
    %v550 = vunpack.c.l.b16 %v454
    %v551 = vunpack.c.l.b16 %v455
    %v552 = vunpack.c.l.b16 %v456
    %v553 = vunpack.c.l.b16 %v457
    %v554 = vunpack.c.l.b16 %v458
    %v555 = vunpack.c.l.b16 %v459
    %v556 = vunpack.c.l.b16 %v460
    %v557 = vunpack.c.l.b16 %v461
    %v558 = vunpack.c.l.b16 %v462
    %v559 = vunpack.c.l.b16 %v463
    %v560 = vunpack.c.l.b16 %v464
    %v561 = vunpack.c.l.b16 %v465
    %v562 = vunpack.c.l.b16 %v466
    %v563 = vunpack.c.l.b16 %v467
    %v564 = vunpack.c.l.b16 %v468
    %v565 = vunpack.c.l.b16 %v469
    %v566 = vunpack.c.l.b16 %v470
    %v567 = vunpack.c.l.b16 %v471
    %v568 = vunpack.c.l.b16 %v472
    %v569 = vunpack.c.l.b16 %v473
    %v570 = vunpack.c.l.b16 %v474
    %v571 = vunpack.c.l.b16 %v475
    %v572 = vunpack.c.l.b16 %v476
    %v573 = vunpack.c.l.b16 %v477
    %v574 = vunpack.c.l.b16 %v478
    %v575 = vunpack.c.l.b16 %v479
    %v576 = vunpack.c.l.b16 %v480
    %v577 = vunpack.c.l.b16 %v481
    %v578 = vunpack.c.l.b16 %v482
    %v579 = vunpack.c.l.b16 %v483
    %v580 = vunpack.c.l.b16 %v484
    %v581 = vunpack.c.l.b16 %v485
    %v582 = vunpack.c.l.b16 %v486
    %v583 = vunpack.c.l.b16 %v487
    %v584 = vunpack.c.l.b16 %v488
    %v585 = vpack.c.b16 %v538, %v537
    %v586 = vpack.c.b16 %v540, %v539
    %v587 = vpack.c.b16 %v542, %v541
    %v588 = vpack.c.b16 %v544, %v543
    %v589 = vpack.c.b16 %v546, %v545
    %v590 = vpack.c.b16 %v548, %v547
    %v591 = vpack.c.b16 %v550, %v549
    %v592 = vpack.c.b16 %v552, %v551
    %v593 = vpack.c.b16 %v554, %v553
    %v594 = vpack.c.b16 %v556, %v555
    %v595 = vpack.c.b16 %v558, %v557
    %v596 = vpack.c.b16 %v560, %v559
    %v597 = vpack.c.b16 %v562, %v561
    %v598 = vpack.c.b16 %v564, %v563
    %v599 = vpack.c.b16 %v566, %v565
    %v600 = vpack.c.b16 %v568, %v567
    %v601 = vpack.c.b16 %v570, %v569
    %v602 = vpack.c.b16 %v572, %v571
    %v603 = vpack.c.b16 %v574, %v573
    %v604 = vpack.c.b16 %v576, %v575
    %v605 = vpack.c.b16 %v578, %v577
    %v606 = vpack.c.b16 %v580, %v579
    %v607 = vpack.c.b16 %v582, %v581
    %v608 = vpack.c.b16 %v584, %v583
    %633 = vmatprep.subr.bf16.mxu0 0
    %634 = vmatpush1.bf16.msra.mxu0 %v585
    %635 = vmatprep.subr.bf16.mxu0 0
    %636 = vmatpush1.bf16.msra.mxu0 %v586
    %637 = vmatprep.subr.bf16.mxu0 0
    %638 = vmatpush1.bf16.msra.mxu0 %v587
    %639 = vmatprep.subr.bf16.mxu0 0
    %640 = vmatpush1.bf16.msra.mxu0 %v588
    %641 = vmatprep.subr.bf16.mxu0 0
    %642 = vmatpush1.bf16.msra.mxu0 %v589
    %643 = vmatprep.subr.bf16.mxu0 0
    %644 = vmatpush1.bf16.msra.mxu0 %v590
    %645 = vmatprep.subr.bf16.mxu0 0
    %646 = vmatpush1.bf16.msra.mxu0 %v591
    %647 = vmatprep.subr.bf16.mxu0 0
    %648 = vmatpush1.bf16.msra.mxu0 %v592
    %649 = vmatprep.subr.bf16.mxu0 0
    %650 = vmatpush1.bf16.msra.mxu0 %v593
    %651 = vmatprep.subr.bf16.mxu0 0
    %652 = vmatpush1.bf16.msra.mxu0 %v594
    %653 = vmatprep.subr.bf16.mxu0 0
    %654 = vmatpush1.bf16.msra.mxu0 %v595
    %655 = vmatprep.subr.bf16.mxu0 0
    %656 = vmatpush1.bf16.msra.mxu0 %v596
    %657 = vmatprep.subr.bf16.mxu0 0
    %658 = vmatpush1.bf16.msra.mxu0 %v597
    %659 = vmatprep.subr.bf16.mxu0 0
    %660 = vmatpush1.bf16.msra.mxu0 %v598
    %661 = vmatprep.subr.bf16.mxu0 0
    %662 = vmatpush1.bf16.msra.mxu0 %v599
    %663 = vmatprep.subr.bf16.mxu0 0
    %664 = vmatpush1.bf16.msra.mxu0 %v600
    %665 = vmatprep.mubr.bf16.mxu0 %v439
    %666 = vmatmul.mubr.bf16.gmra.mrb[0].mxu0 %v438
    %v667 = vpop.f32.mrb[0].mxu0
    %v668 = vadd.f32 0.0, %v667
    %v669 = vpop.f32.mrb[0].mxu0
    %v670 = vpop.f32.mrb[0].mxu0
    %v671 = vpop.f32.mrb[0].mxu0
    %672 = vdwg.mxu0
    %673 = vmatprep.subr.bf16.mxu0 0
    %674 = vmatpush1.bf16.msra.mxu0 %v601
    %675 = vmatprep.subr.bf16.mxu0 0
    %676 = vmatpush1.bf16.msra.mxu0 %v602
    %677 = vmatprep.subr.bf16.mxu0 0
    %678 = vmatpush1.bf16.msra.mxu0 %v603
    %679 = vmatprep.subr.bf16.mxu0 0
    %680 = vmatpush1.bf16.msra.mxu0 %v604
    %681 = vmatprep.subr.bf16.mxu0 0
    %682 = vmatpush1.bf16.msra.mxu0 %v605
    %683 = vmatprep.subr.bf16.mxu0 0
    %684 = vmatpush1.bf16.msra.mxu0 %v606
    %685 = vmatprep.subr.bf16.mxu0 0
    %686 = vmatpush1.bf16.msra.mxu0 %v607
    %687 = vmatprep.subr.bf16.mxu0 0
    %688 = vmatpush1.bf16.msra.mxu0 %v608
    %689 = vmatprep.subr.bf16.mxu0 0
    %690 = vmatpush1.bf16.msra.mxu0 0
    %691 = vmatprep.subr.bf16.mxu0 0
    %692 = vmatpush1.bf16.msra.mxu0 0
    %693 = vmatprep.subr.bf16.mxu0 0
    %694 = vmatpush1.bf16.msra.mxu0 0
    %695 = vmatprep.subr.bf16.mxu0 0
    %696 = vmatpush1.bf16.msra.mxu0 0
    %697 = vmatprep.subr.bf16.mxu0 0
    %698 = vmatpush1.bf16.msra.mxu0 0
    %699 = vmatprep.subr.bf16.mxu0 0
    %700 = vmatpush1.bf16.msra.mxu0 0
    %701 = vmatprep.subr.bf16.mxu0 0
    %702 = vmatpush1.bf16.msra.mxu0 0
    %703 = vmatprep.subr.bf16.mxu0 0
    %704 = vmatpush1.bf16.msra.mxu0 0
    %705 = vmatprep.mubr.bf16.mxu0 0
    %706 = vmatmul.mubr.bf16.gmra.mrb[0].mxu0 %v440
    %v707 = vpop.f32.mrb[0].mxu0
    %v708 = vadd.f32 %v668, %v707
    %v709 = vpop.f32.mrb[0].mxu0
    %v710 = vpop.f32.mrb[0].mxu0
    %v711 = vpop.f32.mrb[0].mxu0
    %712 = vdwg.mxu0
    %v713 = vadd.f32 %v437, %v708
    %714 = vst [vmem:[#allocation2] sm:$0xff] %v713
    // Predicated region
    $region30: #{byol_projection_head.1} parent=1 // pred_check
      %p715 = pneg %p25
    $region31: #{byol_projection_head.1} parent=1 // pred_check_branch
      %717 = sbr.rel (%p715) target = $region33
    $region32: #{byol_projection_head.1} parent=1 // pred_region
      %v718 = vld [vmem:[#allocation2] sm:$0xff]
      %v719 = vld [vmem:[%s5] sm:$0x1]
      %v721 = vlaneseq
      %v722 = vshrl.u32 %v721, 7
      %v723 = vsub.s32 0, %v722
      %v724 = vrot.slane %v719, %v723
      %v726 = vadd.f32 %v718, %v724
      %727 = vst [vmem:[#allocation2] sm:$0xff] %v726
    $region33: #{byol_projection_head.1} parent=1 // pred_fallthru
      _
    // Predicated region
    $region34: #{byol_projection_head.1} parent=1 // pred_check
      _
    $region35: #{byol_projection_head.1} parent=1 // pred_check_branch
      %729 = sbr.rel (0) target = $region37
    $region36: #{byol_projection_head.1} parent=1 // pred_region
      %s731 = ssub.s32 128, 128
      %732 = vsyncadd [#allocation3], %s731
      %s734 = sshll.u32 [#allocation2], 4
      %s735 = int_to_ptr.vmem [resolvable:$true] %s734
      %737 = dma.vmem_to_hbm [thread:$0]  %s735, 128, %s6, [#allocation3]
    $region37: #{byol_projection_head.1} parent=1 // pred_fallthru
      _
    // Predicated region
    $region38: #{byol_projection_head.1} parent=1 // pred_check
      _
    $region39: #{byol_projection_head.1} parent=1 // pred_check_branch
      %739 = sbr.rel (0) target = $region41
    $region40: #{byol_projection_head.1} parent=1 // pred_region
      %740 = dma.done [#allocation3], 128
    $region41: #{byol_projection_head.1} parent=1 // pred_fallthru
      _
    %741 = vsyncpa [#allocation3], 1

</llo_original>
